<compile_context>
chip_gen: v7x
topology: tpu7x:2x2x1
jax: 0.10.0
libtpu: 0.0.40
codegen_flags: <defaults>
</compile_context>

<pallas_src>
import functools

import jax
import jax.numpy as jnp
from jax.experimental import pallas as pl
from jax.experimental.pallas import tpu as pltpu


def _procrustes_stats_kernel(weight_thresh, eps,
                             w_ref, src_ref, ref_ref, out_ref):
    # Block layout: batch tile leading, xyz on sublanes, N points on lanes.
    w = w_ref[...]       # (Bt, 1, N)
    src = src_ref[...]   # (Bt, 3, N)
    ref = ref_ref[...]   # (Bt, 3, N)

    # threshold + normalize weights (matches torch.where / sum(dim=1) + eps)
    w = jnp.where(w < weight_thresh, jnp.zeros_like(w), w)
    wsum = jnp.sum(w, axis=-1, keepdims=True)                 # (Bt, 1, 1)
    w = w * pl.reciprocal(wsum + eps, approx=True)            # (Bt, 1, N)

    # weighted centroids (lane reductions)
    c_s = jnp.sum(src * w, axis=-1, keepdims=True)            # (Bt, 3, 1)
    c_r = jnp.sum(ref * w, axis=-1, keepdims=True)            # (Bt, 3, 1)

    src_c = src - c_s                                         # (Bt, 3, N)
    wref_c = w * (ref - c_r)                                  # (Bt, 3, N)

    # H[b, d, e] = sum_n src_c[b, d, n] * w[b, n] * ref_c[b, e, n]
    # Single batched MXU contraction over the lane axis (same pattern as
    # 'bqd,bkd->bqk' in flash attention).
    H = jnp.einsum('bdn,ben->bde', src_c, wref_c,
                   preferred_element_type=jnp.float32)        # (Bt, 3, 3)

    # Pack H | c_s | c_r into one (Bt, 3, 5) slab -> one output DMA per step.
    out_ref[...] = jnp.concatenate([H, c_s, c_r], axis=-1)


def _procrustes_stats(src_points, ref_points, weights, weight_thresh, eps):
    B, N, _ = src_points.shape
    # Transpose so N is lane-dense (done once in the wrapper).
    src_t = jnp.swapaxes(src_points, 1, 2).astype(jnp.float32)   # (B, 3, N)
    ref_t = jnp.swapaxes(ref_points, 1, 2).astype(jnp.float32)   # (B, 3, N)
    w_t = jnp.reshape(weights.astype(jnp.float32), (B, 1, N))    # (B, 1, N)

    # Batch tile: amortize the ~0.35us/step overhead while keeping the
    # double-buffered working set well inside scoped VMEM.
    # Per batch element per step: 3 arrays x 2 buffers x 8 sublanes x Npad x 4B.
    n_pad = ((N + 127) // 128) * 128
    bytes_per_batch = 3 * 2 * 8 * n_pad * 4
    budget = 12 * 1024 * 1024
    bt = int(max(1, min(B, 8, budget // max(bytes_per_batch, 1))))
    b_pad = ((B + bt - 1) // bt) * bt
    if b_pad != B:
        pad = b_pad - B
        src_t = jnp.pad(src_t, ((0, pad), (0, 0), (0, 0)))
        ref_t = jnp.pad(ref_t, ((0, pad), (0, 0), (0, 0)))
        w_t = jnp.pad(w_t, ((0, pad), (0, 0), (0, 0)))

    kernel = functools.partial(_procrustes_stats_kernel,
                               float(weight_thresh), float(eps))
    grid_spec = pltpu.PrefetchScalarGridSpec(
        num_scalar_prefetch=0,
        grid=(b_pad // bt,),
        in_specs=[
            pl.BlockSpec((bt, 1, N), lambda i: (i, 0, 0)),
            pl.BlockSpec((bt, 3, N), lambda i: (i, 0, 0)),
            pl.BlockSpec((bt, 3, N), lambda i: (i, 0, 0)),
        ],
        out_specs=pl.BlockSpec((bt, 3, 5), lambda i: (i, 0, 0)),
    )
    stats = pl.pallas_call(
        kernel,
        out_shape=jax.ShapeDtypeStruct((b_pad, 3, 5), jnp.float32),
        grid_spec=grid_spec,
        compiler_params=pltpu.CompilerParams(
            dimension_semantics=("parallel",),   # sharded across TCs on v7x
            vmem_limit_bytes=32 * 1024 * 1024),  # raise v5e's 16 MiB default
    )(w_t, src_t, ref_t)

    stats = stats[:B]
    H = stats[:, :, :3]                # (B, 3, 3)
    src_centroid = stats[:, :, 3]      # (B, 3)
    ref_centroid = stats[:, :, 4]      # (B, 3)
    return H, src_centroid, ref_centroid


def weighted_procrustes(src_points, ref_points, weights=None,
                        weight_thresh=0.0, eps=1e-05, return_transform=False):
    src_points = jnp.asarray(src_points, jnp.float32)
    ref_points = jnp.asarray(ref_points, jnp.float32)
    squeeze_first = False
    if src_points.ndim == 2:
        src_points = src_points[None]
        ref_points = ref_points[None]
        if weights is not None:
            weights = jnp.asarray(weights, jnp.float32)[None]
        squeeze_first = True
    batch_size = src_points.shape[0]
    if weights is None:
        weights = jnp.ones_like(src_points[:, :, 0])
    weights = jnp.asarray(weights, jnp.float32)

    # Pallas kernel: weighted centroids + 3x3 cross-covariance, reduced over N.
    H, src_centroid, ref_centroid = _procrustes_stats(
        src_points, ref_points, weights, weight_thresh, eps)

    # TODO(synk): 3x3 SVD has no Pallas equivalent; done in plain JAX (the
    # reference torch code likewise moves it to CPU).
    U, _, Vh = jnp.linalg.svd(H)
    V = jnp.swapaxes(Vh, -1, -2)
    Ut = jnp.swapaxes(U, -1, -2)
    sign = jnp.sign(jnp.linalg.det(V @ Ut))
    diag = jnp.stack(
        [jnp.ones_like(sign), jnp.ones_like(sign), sign], axis=-1)  # (B, 3)
    eye = jax.vmap(jnp.diag)(diag)                                  # (B, 3, 3)
    R = V @ eye @ Ut
    t = ref_centroid - jnp.einsum('bij,bj->bi', R, src_centroid)

    if return_transform:
        transform = jnp.broadcast_to(jnp.eye(4, dtype=jnp.float32),
                                     (batch_size, 4, 4))
        transform = transform.at[:, :3, :3].set(R)
        transform = transform.at[:, :3, 3].set(t)
        if squeeze_first:
            transform = transform[0]
        return transform
    if squeeze_first:
        R = R[0]
        t = t[0]
    return R, t


class WeightedProcrustes:
    def __init__(self, weight_thresh=0.0, eps=1e-05, return_transform=False):
        self.weight_thresh = weight_thresh
        self.eps = eps
        self.return_transform = return_transform

    def __call__(self, src_points, tgt_points, weights=None):
        return weighted_procrustes(
            src_points, tgt_points, weights=weights,
            weight_thresh=self.weight_thresh, eps=self.eps,
            return_transform=self.return_transform)


if __name__ == "__main__":
    key = jax.random.PRNGKey(0)
    k1, k2, k3 = jax.random.split(key, 3)
    B, N = 2, 128
    src = jax.random.normal(k1, (B, N, 3), dtype=jnp.float32)
    ref = jax.random.normal(k2, (B, N, 3), dtype=jnp.float32)
    w = jax.random.uniform(k3, (B, N), dtype=jnp.float32)

    module = WeightedProcrustes(weight_thresh=0.0, eps=1e-05,
                                return_transform=False)
    R, t = module(src, ref, w)
    R = jax.block_until_ready(R)
    t = jax.block_until_ready(t)

    # sanity: R should be (close to) orthogonal
    ortho_err = jnp.max(jnp.abs(jnp.einsum('bij,bkj->bik', R, R)
                                - jnp.eye(3)[None]))
    assert R.shape == (B, 3, 3) and t.shape == (B, 3)
    assert float(ortho_err) < 1e-3

    # also exercise the single-cloud (2D input) path
    R1, t1 = module(src[0], ref[0], w[0])
    R1 = jax.block_until_ready(R1)
    assert R1.shape == (3, 3) and t1.shape == (3,)

    print("KERNEL_OK")
</pallas_src>

<mosaic_0001>
module attributes {stable_mosaic.version = 11 : i64} {
  func.func @_procrustes_stats_kernel(%arg0: i32, %arg1: memref<2x1x128xf32, #tpu.memory_space<vmem>>, %arg2: memref<2x3x128xf32, #tpu.memory_space<vmem>>, %arg3: memref<2x3x128xf32, #tpu.memory_space<vmem>>, %arg4: memref<2x3x5xf32, #tpu.memory_space<vmem>>) attributes {dimension_semantics = [#tpu.dimension_semantics<parallel>], iteration_bounds = array<i64: 1>, scalar_prefetch = 0 : i64, scratch_operands = 0 : i64, tpu.core_type = #tpu.core_type<tc>, window_params = [{transform_indices = @transform_0, window_bounds = array<i64: 2, 1, 128>}, {transform_indices = @transform_1, window_bounds = array<i64: 2, 3, 128>}, {transform_indices = @transform_2, window_bounds = array<i64: 2, 3, 128>}, {transform_indices = @transform_3, window_bounds = array<i64: 2, 3, 5>}]} {
    %c0 = arith.constant 0 : index
    %c0_0 = arith.constant 0 : index
    %c0_1 = arith.constant 0 : index
    %0 = vector.load %arg1[%c0, %c0_0, %c0_1] : memref<2x1x128xf32, #tpu.memory_space<vmem>>, vector<2x1x128xf32>
    %c0_2 = arith.constant 0 : index
    %c0_3 = arith.constant 0 : index
    %c0_4 = arith.constant 0 : index
    %1 = vector.load %arg2[%c0_2, %c0_3, %c0_4] : memref<2x3x128xf32, #tpu.memory_space<vmem>>, vector<2x3x128xf32>
    %c0_5 = arith.constant 0 : index
    %c0_6 = arith.constant 0 : index
    %c0_7 = arith.constant 0 : index
    %2 = vector.load %arg3[%c0_5, %c0_6, %c0_7] : memref<2x3x128xf32, #tpu.memory_space<vmem>>, vector<2x3x128xf32>
    %cst = arith.constant 0.000000e+00 : f32
    %3 = vector.broadcast %cst : f32 to vector<2x1x128xf32>
    %4 = arith.cmpf olt, %0, %3 : vector<2x1x128xf32>
    %cst_8 = arith.constant 0.000000e+00 : f32
    %5 = vector.broadcast %cst_8 : f32 to vector<2x1x128xf32>
    %6 = arith.select %4, %5, %0 : vector<2x1x128xi1>, vector<2x1x128xf32>
    %cst_9 = arith.constant dense<0.000000e+00> : vector<2x1xf32>
    %7 = vector.multi_reduction <add>, %6, %cst_9 [2] : vector<2x1x128xf32> to vector<2x1xf32>
    %8 = vector.shape_cast %7 : vector<2x1xf32> to vector<2x1x1xf32>
    %cst_10 = arith.constant 9.99999974E-6 : f32
    %9 = vector.broadcast %cst_10 : f32 to vector<2x1x1xf32>
    %10 = arith.addf %8, %9 : vector<2x1x1xf32>
    %11 = tpu.reciprocal %10 {approx = true} : vector<2x1x1xf32> -> vector<2x1x1xf32>
    %12 = vector.broadcast %11 : vector<2x1x1xf32> to vector<2x1x128xf32>
    %13 = arith.mulf %6, %12 : vector<2x1x128xf32>
    %14 = vector.broadcast %13 : vector<2x1x128xf32> to vector<2x3x128xf32>
    %15 = arith.mulf %1, %14 : vector<2x3x128xf32>
    %cst_11 = arith.constant dense<0.000000e+00> : vector<2x3xf32>
    %16 = vector.multi_reduction <add>, %15, %cst_11 [2] : vector<2x3x128xf32> to vector<2x3xf32>
    %17 = vector.shape_cast %16 : vector<2x3xf32> to vector<2x3x1xf32>
    %18 = vector.broadcast %13 : vector<2x1x128xf32> to vector<2x3x128xf32>
    %19 = arith.mulf %2, %18 : vector<2x3x128xf32>
    %cst_12 = arith.constant dense<0.000000e+00> : vector<2x3xf32>
    %20 = vector.multi_reduction <add>, %19, %cst_12 [2] : vector<2x3x128xf32> to vector<2x3xf32>
    %21 = vector.shape_cast %20 : vector<2x3xf32> to vector<2x3x1xf32>
    %22 = vector.broadcast %17 : vector<2x3x1xf32> to vector<2x3x128xf32>
    %23 = arith.subf %1, %22 : vector<2x3x128xf32>
    %24 = vector.broadcast %21 : vector<2x3x1xf32> to vector<2x3x128xf32>
    %25 = arith.subf %2, %24 : vector<2x3x128xf32>
    %26 = vector.broadcast %13 : vector<2x1x128xf32> to vector<2x3x128xf32>
    %27 = arith.mulf %26, %25 : vector<2x3x128xf32>
    "tpu.trace_start"() <{level = 10 : i32, message = "bdn,ben->bde"}> : () -> ()
    %cst_13 = arith.constant dense<0.000000e+00> : vector<2x3x3xf32>
    %28 = tpu.matmul %23, %27, %cst_13 {dimension_numbers = #tpu.dot_dimension_numbers<[2], [2], [1], [1], [0, 0, 0, 1, 1, 1], [0], [0]>} : vector<2x3x128xf32>, vector<2x3x128xf32>, vector<2x3x3xf32> -> vector<2x3x3xf32>
    "tpu.trace_stop"() : () -> ()
    %29 = tpu.concatenate %28, %17, %21 in 2 : vector<2x3x3xf32>, vector<2x3x1xf32>, vector<2x3x1xf32> -> vector<2x3x5xf32>
    %c0_14 = arith.constant 0 : index
    %c0_15 = arith.constant 0 : index
    %c0_16 = arith.constant 0 : index
    %30 = vector.load %arg4[%c0_14, %c0_15, %c0_16] : memref<2x3x5xf32, #tpu.memory_space<vmem>>, vector<2x3x5xf32>
    tpu.vector_store %arg4[%c0_14, %c0_15, %c0_16], %29 {strides = array<i32>} : memref<2x3x5xf32, #tpu.memory_space<vmem>>, vector<2x3x5xf32>,
    return
  }
  func.func @transform_0(%arg0: i32) -> (i32, i32, i32) {
    %c0_i32 = arith.constant 0 : i32
    %c0_i32_0 = arith.constant 0 : i32
    %c0_i32_1 = arith.constant 0 : i32
    return %arg0, %c0_i32, %c0_i32_0 : i32, i32, i32
  }
  func.func @transform_1(%arg0: i32) -> (i32, i32, i32) {
    %c0_i32 = arith.constant 0 : i32
    %c0_i32_0 = arith.constant 0 : i32
    %c0_i32_1 = arith.constant 0 : i32
    return %arg0, %c0_i32, %c0_i32_0 : i32, i32, i32
  }
  func.func @transform_2(%arg0: i32) -> (i32, i32, i32) {
    %c0_i32 = arith.constant 0 : i32
    %c0_i32_0 = arith.constant 0 : i32
    %c0_i32_1 = arith.constant 0 : i32
    return %arg0, %c0_i32, %c0_i32_0 : i32, i32, i32
  }
  func.func @transform_3(%arg0: i32) -> (i32, i32, i32) {
    %c0_i32 = arith.constant 0 : i32
    %c0_i32_0 = arith.constant 0 : i32
    %c0_i32_1 = arith.constant 0 : i32
    return %arg0, %c0_i32, %c0_i32_0 : i32, i32, i32
  }
}

</mosaic_0001>

<llo_original>
// kernel: tpu_custom_call.1
$region0: #{tpu_custom_call.1}
  #allocation0 [shape = 'u32[]', space=smem, size = 0x4, offset = 0x4, fixed_abs, tag = 'smem constant byte address 0x4 - core index']
  #allocation1 [shape = 'u32[144,128]{1,0:T(1,128)}', space=vmem, size = 0x12000, scoped, tag = 'internal scratch']
  %s0 = inlined_call_operand.vmem [shape: f32[2,1,128], index: 0, kind: input, shape index: {}]
  %s1 = inlined_call_operand.vmem [shape: f32[2,3,128], index: 1, kind: input, shape index: {}]
  %s2 = inlined_call_operand.vmem [shape: f32[2,3,128], index: 2, kind: input, shape index: {}]
  %s3 = inlined_call_operand.vmem [shape: f32[2,3,5], index: 3, kind: output, shape index: {}]
  %s4 = sld [smem:[#allocation0]]
  $region22: #{tpu_custom_call.1} parent=0
    _
  %s6 = ssub.s32 1, %s4
  %s7 = scalar_select 0, %s6, %s4
  // Predicated region
  $region2: #{tpu_custom_call.1} parent=0 // pred_check
    _
  $region3: #{tpu_custom_call.1} parent=0 // pred_check_branch
    %9 = sbr.rel (0) target = $region5
  $region4: #{tpu_custom_call.1} parent=0 // pred_region
    _
  $region5: #{tpu_custom_call.1} parent=0 // pred_fallthru
    _
  // Predicated region
  $region6: #{tpu_custom_call.1} parent=0 // pred_check
    _
  $region7: #{tpu_custom_call.1} parent=0 // pred_check_branch
    %11 = sbr.rel (0) target = $region9
  $region8: #{tpu_custom_call.1} parent=0 // pred_region
    _
  $region9: #{tpu_custom_call.1} parent=0 // pred_fallthru
    _
  // Predicated region
  $region10: #{tpu_custom_call.1} parent=0 // pred_check
    _
  $region11: #{tpu_custom_call.1} parent=0 // pred_check_branch
    %13 = sbr.rel (0) target = $region13
  $region12: #{tpu_custom_call.1} parent=0 // pred_region
    _
  $region13: #{tpu_custom_call.1} parent=0 // pred_fallthru
    _
  %v14 = vld [vmem:[%s0] sm:$0x1]
  %v15 = vld [vmem:[%s0 + $0x1] sm:$0x1]
  %v16 = vld [vmem:[%s1] sm:$0x7]
  %v17 = vld [vmem:[%s1 + $0x4] sm:$0x7]
  %v18 = vld [vmem:[%s2] sm:$0x7]
  %v19 = vld [vmem:[%s2 + $0x4] sm:$0x7]
  %vm20 = vcmp.lt.f32.partialorder %v14, 0.0
  %vm21 = vcmp.lt.f32.partialorder %v15, 0.0
  %v22 = vsel %vm20, 0.0, %v14
  %v23 = vsel %vm21, 0.0, %v15
  %vm24 = vcmask 1040384
  %v25 = vsel %vm24, %v22, 0.0
  %26 = vadd.xlane.f32.xlu0 %v25
  %v27 = vpop.xlane.xlu0 %26
  %v28 = vsel %vm24, %v23, 0.0
  %29 = vadd.xlane.f32.xlu0 %v28
  %v30 = vpop.xlane.xlu0 %29
  %v31 = vadd.f32 %v27, 1e-05
  %v32 = vadd.f32 %v30, 1e-05
  %v33 = vrcp.pop %v31
  %v34 = vrcp.pop %v32
  %v35 = vmul.f32 %v22, %v33
  %v36 = vmul.f32 %v23, %v34
  %v39 = vlaneseq
  %v40 = vshrl.u32 %v39, 7
  %v41 = vsub.s32 0, %v40
  %v42 = vrot.slane %v35, %v41
  %v43 = vlaneseq
  %v44 = vshrl.u32 %v43, 7
  %v45 = vsub.s32 0, %v44
  %v46 = vrot.slane %v36, %v45
  %v49 = vmul.f32 %v16, %v42
  %v50 = vmul.f32 %v17, %v46
  %vm51 = vcmask 1042432
  %v52 = vsel %vm51, %v49, 0.0
  %53 = vadd.xlane.f32.xlu0 %v52
  %v54 = vpop.xlane.xlu0 %53
  %v55 = vsel %vm51, %v50, 0.0
  %56 = vadd.xlane.f32.xlu0 %v55
  %v57 = vpop.xlane.xlu0 %56
  %v58 = vmul.f32 %v18, %v42
  %v59 = vmul.f32 %v19, %v46
  %v60 = vsel %vm51, %v58, 0.0
  %61 = vadd.xlane.f32.xlu0 %v60
  %v62 = vpop.xlane.xlu0 %61
  %v63 = vsel %vm51, %v59, 0.0
  %64 = vadd.xlane.f32.xlu0 %v63
  %v65 = vpop.xlane.xlu0 %64
  %v66 = vsub.f32 %v16, %v54
  %v67 = vsub.f32 %v17, %v57
  %v68 = vsub.f32 %v18, %v62
  %v69 = vsub.f32 %v19, %v65
  %v70 = vmul.f32 %v42, %v68
  %v71 = vmul.f32 %v46, %v69
  %72 = vmatprep.subr.mxu0 0.0
  %73 = vmatpush1.xpose.msra.mxu0 %v70
  %74 = vmatprep.subr.mxu0 0.0
  %75 = vmatpush1.xpose.msra.mxu0 0.0
  %76 = vmatprep.subr.mxu0 0.0
  %77 = vmatpush1.xpose.msra.mxu0 0.0
  %78 = vmatprep.subr.mxu0 0.0
  %79 = vmatpush1.xpose.msra.mxu0 0.0
  %80 = vmatprep.subr.mxu0 0.0
  %81 = vmatpush1.xpose.msra.mxu0 0.0
  %82 = vmatprep.subr.mxu0 0.0
  %83 = vmatpush1.xpose.msra.mxu0 0.0
  %84 = vmatprep.subr.mxu0 0.0
  %85 = vmatpush1.xpose.msra.mxu0 0.0
  %86 = vmatprep.subr.mxu0 0.0
  %87 = vmatpush1.xpose.msra.mxu0 0.0
  %88 = vmatprep.subr.mxu0 0.0
  %89 = vmatpush1.xpose.msra.mxu0 0.0
  %90 = vmatprep.subr.mxu0 0.0
  %91 = vmatpush1.xpose.msra.mxu0 0.0
  %92 = vmatprep.subr.mxu0 0.0
  %93 = vmatpush1.xpose.msra.mxu0 0.0
  %94 = vmatprep.subr.mxu0 0.0
  %95 = vmatpush1.xpose.msra.mxu0 0.0
  %96 = vmatprep.subr.mxu0 0.0
  %97 = vmatpush1.xpose.msra.mxu0 0.0
  %98 = vmatprep.subr.mxu0 0.0
  %99 = vmatpush1.xpose.msra.mxu0 0.0
  %100 = vmatprep.subr.mxu0 0.0
  %101 = vmatpush1.xpose.msra.mxu0 0.0
  %102 = vmatprep.subr.mxu0 0.0
  %103 = vmatpush1.xpose.msra.mxu0 0.0
  %104 = vmatprep.subr.mxu0 0.0
  %105 = vmatpush1.xpose.msra.mxu0 0.0
  %106 = vmatprep.subr.mxu0 0.0
  %107 = vmatpush1.xpose.msra.mxu0 0.0
  %108 = vmatprep.subr.mxu0 0.0
  %109 = vmatpush1.xpose.msra.mxu0 0.0
  %110 = vmatprep.subr.mxu0 0.0
  %111 = vmatpush1.xpose.msra.mxu0 0.0
  %112 = vmatprep.subr.mxu0 0.0
  %113 = vmatpush1.xpose.msra.mxu0 0.0
  %114 = vmatprep.subr.mxu0 0.0
  %115 = vmatpush1.xpose.msra.mxu0 0.0
  %116 = vmatprep.subr.mxu0 0.0
  %117 = vmatpush1.xpose.msra.mxu0 0.0
  %118 = vmatprep.subr.mxu0 0.0
  %119 = vmatpush1.xpose.msra.mxu0 0.0
  %120 = vmatprep.subr.mxu0 0.0
  %121 = vmatpush1.xpose.msra.mxu0 0.0
  %122 = vmatprep.subr.mxu0 0.0
  %123 = vmatpush1.xpose.msra.mxu0 0.0
  %124 = vmatprep.subr.mxu0 0.0
  %125 = vmatpush1.xpose.msra.mxu0 0.0
  %126 = vmatprep.subr.mxu0 0.0
  %127 = vmatpush1.xpose.msra.mxu0 0.0
  %128 = vmatprep.subr.mxu0 0.0
  %129 = vmatpush1.xpose.msra.mxu0 0.0
  %130 = vmatprep.subr.mxu0 0.0
  %131 = vmatpush1.xpose.msra.mxu0 0.0
  %132 = vmatprep.subr.mxu0 0.0
  %133 = vmatpush1.xpose.msra.mxu0 0.0
  %134 = vmatprep.subr.mxu0 0.0
  %135 = vmatpush1.xpose.msra.mxu0 0.0
  %136 = vmatprep.mubr.f32.mxu0 0.0
  %137 = vmatmul.mubr.f32.gmra.mrb[0].mxu0 %v66
  %v138 = vpop.f32.mrb[0].mxu0
  %v139 = vadd.f32 0.0, %v138
  %v140 = vpop.f32.mrb[0].mxu0
  %141 = vdwg.mxu0
  %142 = vmatprep.subr.mxu0 0.0
  %143 = vmatpush1.xpose.msra.mxu0 %v71
  %144 = vmatprep.subr.mxu0 0.0
  %145 = vmatpush1.xpose.msra.mxu0 0.0
  %146 = vmatprep.subr.mxu0 0.0
  %147 = vmatpush1.xpose.msra.mxu0 0.0
  %148 = vmatprep.subr.mxu0 0.0
  %149 = vmatpush1.xpose.msra.mxu0 0.0
  %150 = vmatprep.subr.mxu0 0.0
  %151 = vmatpush1.xpose.msra.mxu0 0.0
  %152 = vmatprep.subr.mxu0 0.0
  %153 = vmatpush1.xpose.msra.mxu0 0.0
  %154 = vmatprep.subr.mxu0 0.0
  %155 = vmatpush1.xpose.msra.mxu0 0.0
  %156 = vmatprep.subr.mxu0 0.0
  %157 = vmatpush1.xpose.msra.mxu0 0.0
  %158 = vmatprep.subr.mxu0 0.0
  %159 = vmatpush1.xpose.msra.mxu0 0.0
  %160 = vmatprep.subr.mxu0 0.0
  %161 = vmatpush1.xpose.msra.mxu0 0.0
  %162 = vmatprep.subr.mxu0 0.0
  %163 = vmatpush1.xpose.msra.mxu0 0.0
  %164 = vmatprep.subr.mxu0 0.0
  %165 = vmatpush1.xpose.msra.mxu0 0.0
  %166 = vmatprep.subr.mxu0 0.0
  %167 = vmatpush1.xpose.msra.mxu0 0.0
  %168 = vmatprep.subr.mxu0 0.0
  %169 = vmatpush1.xpose.msra.mxu0 0.0
  %170 = vmatprep.subr.mxu0 0.0
  %171 = vmatpush1.xpose.msra.mxu0 0.0
  %172 = vmatprep.subr.mxu0 0.0
  %173 = vmatpush1.xpose.msra.mxu0 0.0
  %174 = vmatprep.subr.mxu0 0.0
  %175 = vmatpush1.xpose.msra.mxu0 0.0
  %176 = vmatprep.subr.mxu0 0.0
  %177 = vmatpush1.xpose.msra.mxu0 0.0
  %178 = vmatprep.subr.mxu0 0.0
  %179 = vmatpush1.xpose.msra.mxu0 0.0
  %180 = vmatprep.subr.mxu0 0.0
  %181 = vmatpush1.xpose.msra.mxu0 0.0
  %182 = vmatprep.subr.mxu0 0.0
  %183 = vmatpush1.xpose.msra.mxu0 0.0
  %184 = vmatprep.subr.mxu0 0.0
  %185 = vmatpush1.xpose.msra.mxu0 0.0
  %186 = vmatprep.subr.mxu0 0.0
  %187 = vmatpush1.xpose.msra.mxu0 0.0
  %188 = vmatprep.subr.mxu0 0.0
  %189 = vmatpush1.xpose.msra.mxu0 0.0
  %190 = vmatprep.subr.mxu0 0.0
  %191 = vmatpush1.xpose.msra.mxu0 0.0
  %192 = vmatprep.subr.mxu0 0.0
  %193 = vmatpush1.xpose.msra.mxu0 0.0
  %194 = vmatprep.subr.mxu0 0.0
  %195 = vmatpush1.xpose.msra.mxu0 0.0
  %196 = vmatprep.subr.mxu0 0.0
  %197 = vmatpush1.xpose.msra.mxu0 0.0
  %198 = vmatprep.subr.mxu0 0.0
  %199 = vmatpush1.xpose.msra.mxu0 0.0
  %200 = vmatprep.subr.mxu0 0.0
  %201 = vmatpush1.xpose.msra.mxu0 0.0
  %202 = vmatprep.subr.mxu0 0.0
  %203 = vmatpush1.xpose.msra.mxu0 0.0
  %204 = vmatprep.subr.mxu0 0.0
  %205 = vmatpush1.xpose.msra.mxu0 0.0
  %206 = vmatprep.mubr.f32.mxu0 0.0
  %207 = vmatmul.mubr.f32.gmra.mrb[0].mxu0 %v67
  %v208 = vpop.f32.mrb[0].mxu0
  %v209 = vadd.f32 0.0, %v208
  %v210 = vpop.f32.mrb[0].mxu0
  %211 = vdwg.mxu0
  %vm212 = vcmask 23552
  %v213 = vsel %vm212, %v139, %v54
  %v214 = vsel %vm212, %v209, %v57
  %vm215 = vcmask 31744
  %v216 = vsel %vm215, %v213, %v62
  %v217 = vsel %vm215, %v214, %v65
  %vm218 = vcmask 34816
  %219 = vst.msk [vmem:[%s3] sm:$0x7] %vm218, %v216
  %220 = vst.msk [vmem:[%s3 + $0x4] sm:$0x7] %vm218, %v217
  // Predicated region
  $region14: #{tpu_custom_call.1} parent=0 // pred_check
    _
  $region15: #{tpu_custom_call.1} parent=0 // pred_check_branch
    %222 = sbr.rel (0) target = $region17
  $region16: #{tpu_custom_call.1} parent=0 // pred_region
    _
  $region17: #{tpu_custom_call.1} parent=0 // pred_fallthru
    _
  // Predicated region
  $region18: #{tpu_custom_call.1} parent=0 // pred_check
    _
  $region19: #{tpu_custom_call.1} parent=0 // pred_check_branch
    %224 = sbr.rel (0) target = $region21
  $region20: #{tpu_custom_call.1} parent=0 // pred_region
    _
  $region21: #{tpu_custom_call.1} parent=0 // pred_fallthru
    _

</llo_original>
